<compile_context>
chip_gen: v6e
topology: v6e:2x2x1
jax: 0.10.0
libtpu: 0.0.40
codegen_flags: <defaults>
</compile_context>

<pallas_src>
import functools

import jax
import jax.numpy as jnp
from jax.experimental import pallas as pl
from jax.experimental.pallas import tpu as pltpu

HIDDEN = 256


def _round_up(x, m):
    return (x + m - 1) // m * m


def actor_kernel(obs_ref, w1_ref, b1_ref, w2_ref, b2_ref, u_ref, out_ref,
                 *, action_dim):
    # fc1 + ReLU  (MXU matmul, f32 accumulation)
    h = jnp.dot(obs_ref[...], w1_ref[...],
                preferred_element_type=jnp.float32) + b1_ref[...]
    h = jnp.maximum(h, 0.0)

    # fc2 -> logits z.  w2/b2 were replicated 3x along lanes and zero-padded
    # to a 128-multiple by the wrapper, so z is already in the packed layout.
    z = jnp.dot(h, w2_ref[...],
                preferred_element_type=jnp.float32) + b2_ref[...]

    # Shared exponential for sigmoid and softplus (numerically stable).
    e = jnp.exp(-jnp.abs(z))                        # EUP
    sp = jnp.maximum(z, 0.0) + jnp.log(1.0 + e)     # softplus(z)
    p = jnp.where(z >= 0.0, 1.0, e) / (1.0 + e)     # sigmoid(z)

    # Bernoulli sample: u < p  (uniforms tiled identically to z, so every lane
    # section sees the same draw).
    a = (u_ref[...] < p).astype(jnp.float32)
    logp = a * z - sp                               # log_prob(a)
    ent = sp - p * z                                # entropy

    # Lane sections: [0,A) -> actions, [A,2A) -> log_probs, [2A,3A) -> entropy,
    # [3A, P) -> zero padding.  Single full-width (lane-dense) store.
    col = jax.lax.broadcasted_iota(jnp.int32, z.shape, 1)
    out = jnp.where(col < action_dim, a,
                    jnp.where(col < 2 * action_dim, logp,
                              jnp.where(col < 3 * action_dim, ent, 0.0)))
    out_ref[...] = out


def actor_forward(obs, w1, b1, w2, b2, sample_key):
    """obs: [B, obs_dim]; w1: [obs_dim, H]; w2: [H, A] (transposed vs torch)."""
    B, obs_dim = obs.shape
    H, A = w2.shape
    P = _round_up(3 * A, 128)          # packed, lane-dense output width

    # Batch tile: multiples of 256 at scale (fills the 256-wide MXU on
    # v6e/v7x), small tiles stay well inside every chip's scoped VMEM budget.
    if B >= 512:
        TB = 512
    elif B >= 256:
        TB = 256
    else:
        TB = _round_up(B, 8)
    B_pad = _round_up(B, TB)

    pad_w = P - 3 * A
    w2p = jnp.pad(jnp.concatenate([w2, w2, w2], axis=1), ((0, 0), (0, pad_w)))
    b2p = jnp.pad(jnp.concatenate([b2, b2, b2]), (0, pad_w)).reshape(1, P)
    b1r = b1.reshape(1, H)

    # Host-side uniforms (tiled 3x so all lane sections share the same draw).
    u = jax.random.uniform(sample_key, (B, A), jnp.float32)
    u = jnp.pad(jnp.concatenate([u, u, u], axis=1), ((0, 0), (0, pad_w)),
                constant_values=1.0)

    # Pad the batch so the tile divides it exactly.
    obs_p = jnp.pad(obs.astype(jnp.float32), ((0, B_pad - B), (0, 0)))
    u_p = jnp.pad(u, ((0, B_pad - B), (0, 0)), constant_values=1.0)

    kernel = functools.partial(actor_kernel, action_dim=A)

    packed = pl.pallas_call(
        kernel,
        out_shape=jax.ShapeDtypeStruct((B_pad, P), jnp.float32),
        grid=(B_pad // TB,),
        in_specs=[
            pl.BlockSpec((TB, obs_dim), lambda i: (i, 0)),   # obs: streamed
            pl.BlockSpec((obs_dim, H), lambda i: (0, 0)),    # w1: resident
            pl.BlockSpec((1, H), lambda i: (0, 0)),          # b1: resident
            pl.BlockSpec((H, P), lambda i: (0, 0)),          # w2 packed: resident
            pl.BlockSpec((1, P), lambda i: (0, 0)),          # b2 packed: resident
            pl.BlockSpec((TB, P), lambda i: (i, 0)),         # uniforms: streamed
        ],
        out_specs=pl.BlockSpec((TB, P), lambda i: (i, 0)),
        compiler_params=pltpu.CompilerParams(
            dimension_semantics=("parallel",)),
    )(obs_p, w1, b1r, w2p, b2p, u_p)

    packed = packed[:B]
    actions = packed[:, 0:A]
    log_probs = packed[:, A:2 * A]
    entropy = packed[:, 2 * A:3 * A]
    return actions, log_probs, entropy


def init_params(key, obs_dim, action_dim, hidden=HIDDEN):
    """Deterministic init mimicking nn.Linear's U(-1/sqrt(fan_in), 1/sqrt(fan_in))."""
    k1, k2, k3, k4 = jax.random.split(key, 4)
    lim1 = 1.0 / jnp.sqrt(float(obs_dim))
    lim2 = 1.0 / jnp.sqrt(float(hidden))
    w1 = jax.random.uniform(k1, (obs_dim, hidden), jnp.float32, -lim1, lim1)
    b1 = jax.random.uniform(k2, (hidden,), jnp.float32, -lim1, lim1)
    w2 = jax.random.uniform(k3, (hidden, action_dim), jnp.float32, -lim2, lim2)
    b2 = jax.random.uniform(k4, (action_dim,), jnp.float32, -lim2, lim2)
    return w1, b1, w2, b2


if __name__ == "__main__":
    key = jax.random.PRNGKey(0)
    k_obs, k_param, k_samp = jax.random.split(key, 3)

    batch, obs_dim, action_dim = 8, 32, 16
    obs = jax.random.normal(k_obs, (batch, obs_dim), jnp.float32)
    w1, b1, w2, b2 = init_params(k_param, obs_dim, action_dim)

    actions, log_probs, entropy = actor_forward(obs, w1, b1, w2, b2, k_samp)
    jax.block_until_ready((actions, log_probs, entropy))

    # shape / dtype parity with the torch module's forward
    assert actions.shape == (batch, action_dim)
    assert log_probs.shape == (batch, action_dim)
    assert entropy.shape == (batch, action_dim)
    assert actions.dtype == jnp.float32
    assert bool(jnp.all((actions == 0.0) | (actions == 1.0)))

    # pure-JAX reference for log_prob / entropy given the sampled actions
    h_ref = jnp.maximum(jnp.dot(obs, w1, precision="highest") + b1, 0.0)
    z_ref = jnp.dot(h_ref, w2, precision="highest") + b2
    sp_ref = jnp.maximum(z_ref, 0.0) + jnp.log1p(jnp.exp(-jnp.abs(z_ref)))
    p_ref = jax.nn.sigmoid(z_ref)
    assert bool(jnp.allclose(log_probs, actions * z_ref - sp_ref,
                             atol=1e-2, rtol=1e-2))
    assert bool(jnp.allclose(entropy, sp_ref - p_ref * z_ref,
                             atol=1e-2, rtol=1e-2))

    print("KERNEL_OK")
</pallas_src>

<mosaic_0001>
module attributes {stable_mosaic.version = 11 : i64} {
  func.func @actor_kernel(%arg0: i32, %arg1: memref<8x32xf32, #tpu.memory_space<vmem>>, %arg2: memref<32x256xf32, #tpu.memory_space<vmem>>, %arg3: memref<1x256xf32, #tpu.memory_space<vmem>>, %arg4: memref<256x128xf32, #tpu.memory_space<vmem>>, %arg5: memref<1x128xf32, #tpu.memory_space<vmem>>, %arg6: memref<8x128xf32, #tpu.memory_space<vmem>>, %arg7: memref<8x128xf32, #tpu.memory_space<vmem>>) attributes {dimension_semantics = [#tpu.dimension_semantics<parallel>], iteration_bounds = array<i64: 1>, scalar_prefetch = 0 : i64, scratch_operands = 0 : i64, tpu.core_type = #tpu.core_type<tc>, window_params = [{transform_indices = @transform_0, window_bounds = array<i64: 8, 32>}, {pipeline_mode = #tpu.pipeline_mode<synchronous>, transform_indices = @transform_1, window_bounds = array<i64: 32, 256>}, {pipeline_mode = #tpu.pipeline_mode<synchronous>, transform_indices = @transform_2, window_bounds = array<i64: 1, 256>}, {pipeline_mode = #tpu.pipeline_mode<synchronous>, transform_indices = @transform_3, window_bounds = array<i64: 256, 128>}, {pipeline_mode = #tpu.pipeline_mode<synchronous>, transform_indices = @transform_4, window_bounds = array<i64: 1, 128>}, {transform_indices = @transform_5, window_bounds = array<i64: 8, 128>}, {transform_indices = @transform_6, window_bounds = array<i64: 8, 128>}]} {
    %c0 = arith.constant 0 : index
    %c0_0 = arith.constant 0 : index
    %0 = vector.load %arg1[%c0, %c0_0] : memref<8x32xf32, #tpu.memory_space<vmem>>, vector<8x32xf32>
    %c0_1 = arith.constant 0 : index
    %c0_2 = arith.constant 0 : index
    %1 = vector.load %arg2[%c0_1, %c0_2] : memref<32x256xf32, #tpu.memory_space<vmem>>, vector<32x256xf32>
    %cst = arith.constant dense<0.000000e+00> : vector<8x256xf32>
    %2 = tpu.matmul %0, %1, %cst {dimension_numbers = #tpu.dot_dimension_numbers<[1], [0], [0], [1], [0, 0, 1, 1], [], []>} : vector<8x32xf32>, vector<32x256xf32>, vector<8x256xf32> -> vector<8x256xf32>
    %c0_3 = arith.constant 0 : index
    %c0_4 = arith.constant 0 : index
    %3 = vector.load %arg3[%c0_3, %c0_4] : memref<1x256xf32, #tpu.memory_space<vmem>>, vector<1x256xf32>
    %4 = vector.broadcast %3 : vector<1x256xf32> to vector<8x256xf32>
    %5 = arith.addf %2, %4 : vector<8x256xf32>
    %cst_5 = arith.constant 0.000000e+00 : f32
    %6 = vector.broadcast %cst_5 : f32 to vector<8x256xf32>
    %7 = arith.maximumf %5, %6 : vector<8x256xf32>
    %c0_6 = arith.constant 0 : index
    %c0_7 = arith.constant 0 : index
    %8 = vector.load %arg4[%c0_6, %c0_7] : memref<256x128xf32, #tpu.memory_space<vmem>>, vector<256x128xf32>
    %cst_8 = arith.constant dense<0.000000e+00> : vector<8x128xf32>
    %9 = tpu.matmul %7, %8, %cst_8 {dimension_numbers = #tpu.dot_dimension_numbers<[1], [0], [0], [1], [0, 0, 1, 1], [], []>} : vector<8x256xf32>, vector<256x128xf32>, vector<8x128xf32> -> vector<8x128xf32>
    %c0_9 = arith.constant 0 : index
    %c0_10 = arith.constant 0 : index
    %10 = vector.load %arg5[%c0_9, %c0_10] : memref<1x128xf32, #tpu.memory_space<vmem>>, vector<1x128xf32>
    %11 = vector.broadcast %10 : vector<1x128xf32> to vector<8x128xf32>
    %12 = arith.addf %9, %11 : vector<8x128xf32>
    %13 = math.absf %12 : vector<8x128xf32>
    %cst_11 = arith.constant 0.000000e+00 : f32
    %14 = vector.broadcast %cst_11 : f32 to vector<8x128xf32>
    %15 = arith.subf %14, %13 : vector<8x128xf32>
    %16 = math.exp %15 : vector<8x128xf32>
    %cst_12 = arith.constant 0.000000e+00 : f32
    %17 = vector.broadcast %cst_12 : f32 to vector<8x128xf32>
    %18 = arith.maximumf %12, %17 : vector<8x128xf32>
    %cst_13 = arith.constant 1.000000e+00 : f32
    %19 = vector.broadcast %cst_13 : f32 to vector<8x128xf32>
    %20 = arith.addf %19, %16 : vector<8x128xf32>
    %21 = math.log %20 : vector<8x128xf32>
    %22 = arith.addf %18, %21 : vector<8x128xf32>
    %cst_14 = arith.constant 0.000000e+00 : f32
    %23 = vector.broadcast %cst_14 : f32 to vector<8x128xf32>
    %24 = arith.cmpf oge, %12, %23 : vector<8x128xf32>
    %cst_15 = arith.constant 1.000000e+00 : f32
    %25 = vector.broadcast %cst_15 : f32 to vector<8x128xf32>
    %26 = arith.select %24, %25, %16 : vector<8x128xi1>, vector<8x128xf32>
    %cst_16 = arith.constant 1.000000e+00 : f32
    %27 = vector.broadcast %cst_16 : f32 to vector<8x128xf32>
    %28 = arith.addf %27, %16 : vector<8x128xf32>
    %29 = arith.divf %26, %28 : vector<8x128xf32>
    %c0_17 = arith.constant 0 : index
    %c0_18 = arith.constant 0 : index
    %30 = vector.load %arg6[%c0_17, %c0_18] : memref<8x128xf32, #tpu.memory_space<vmem>>, vector<8x128xf32>
    %31 = arith.cmpf olt, %30, %29 : vector<8x128xf32>
    %32 = arith.extui %31 : vector<8x128xi1> to vector<8x128xi32>
    %33 = arith.sitofp %32 : vector<8x128xi32> to vector<8x128xf32>
    %34 = arith.mulf %33, %12 : vector<8x128xf32>
    %35 = arith.subf %34, %22 : vector<8x128xf32>
    %36 = arith.mulf %29, %12 : vector<8x128xf32>
    %37 = arith.subf %22, %36 : vector<8x128xf32>
    %38 = tpu.iota {dimensions = array<i32: 1>} : vector<8x128xi32>
    %c16_i32 = arith.constant 16 : i32
    %39 = vector.broadcast %c16_i32 : i32 to vector<8x128xi32>
    %40 = arith.cmpi slt, %38, %39 : vector<8x128xi32>
    %c32_i32 = arith.constant 32 : i32
    %41 = vector.broadcast %c32_i32 : i32 to vector<8x128xi32>
    %42 = arith.cmpi slt, %38, %41 : vector<8x128xi32>
    %c48_i32 = arith.constant 48 : i32
    %43 = vector.broadcast %c48_i32 : i32 to vector<8x128xi32>
    %44 = arith.cmpi slt, %38, %43 : vector<8x128xi32>
    %cst_19 = arith.constant 0.000000e+00 : f32
    %45 = vector.broadcast %cst_19 : f32 to vector<8x128xf32>
    %46 = arith.select %44, %37, %45 : vector<8x128xi1>, vector<8x128xf32>
    %47 = arith.select %42, %35, %46 : vector<8x128xi1>, vector<8x128xf32>
    %48 = arith.select %40, %33, %47 : vector<8x128xi1>, vector<8x128xf32>
    %c0_20 = arith.constant 0 : index
    %c0_21 = arith.constant 0 : index
    %49 = vector.load %arg7[%c0_20, %c0_21] : memref<8x128xf32, #tpu.memory_space<vmem>>, vector<8x128xf32>
    tpu.vector_store %arg7[%c0_20, %c0_21], %48 {strides = array<i32>} : memref<8x128xf32, #tpu.memory_space<vmem>>, vector<8x128xf32>,
    return
  }
  func.func @transform_0(%arg0: i32) -> (i32, i32) {
    %c0_i32 = arith.constant 0 : i32
    %c0_i32_0 = arith.constant 0 : i32
    return %arg0, %c0_i32 : i32, i32
  }
  func.func @transform_1(%arg0: i32) -> (i32, i32) {
    %c0_i32 = arith.constant 0 : i32
    %c0_i32_0 = arith.constant 0 : i32
    %c0_i32_1 = arith.constant 0 : i32
    return %c0_i32, %c0_i32_0 : i32, i32
  }
  func.func @transform_2(%arg0: i32) -> (i32, i32) {
    %c0_i32 = arith.constant 0 : i32
    %c0_i32_0 = arith.constant 0 : i32
    %c0_i32_1 = arith.constant 0 : i32
    return %c0_i32, %c0_i32_0 : i32, i32
  }
  func.func @transform_3(%arg0: i32) -> (i32, i32) {
    %c0_i32 = arith.constant 0 : i32
    %c0_i32_0 = arith.constant 0 : i32
    %c0_i32_1 = arith.constant 0 : i32
    return %c0_i32, %c0_i32_0 : i32, i32
  }
  func.func @transform_4(%arg0: i32) -> (i32, i32) {
    %c0_i32 = arith.constant 0 : i32
    %c0_i32_0 = arith.constant 0 : i32
    %c0_i32_1 = arith.constant 0 : i32
    return %c0_i32, %c0_i32_0 : i32, i32
  }
  func.func @transform_5(%arg0: i32) -> (i32, i32) {
    %c0_i32 = arith.constant 0 : i32
    %c0_i32_0 = arith.constant 0 : i32
    return %arg0, %c0_i32 : i32, i32
  }
  func.func @transform_6(%arg0: i32) -> (i32, i32) {
    %c0_i32 = arith.constant 0 : i32
    %c0_i32_0 = arith.constant 0 : i32
    return %arg0, %c0_i32 : i32, i32
  }
}

</mosaic_0001>

<llo_original>
// kernel: tpu_custom_call.1
$region0: #{tpu_custom_call.1}
  #allocation0 [shape = 'u32[]', space=smem, size = 0x4, offset = 0x4, fixed_abs, tag = 'smem constant byte address 0x4 - core index']
  #allocation1 [shape = 'u32[144,128]{1,0:T(1,128)}', space=vmem, size = 0x12000, scoped, tag = 'internal scratch']
  %s0 = inlined_call_operand.hbm [shape: f32[8,32], index: 0, kind: input, shape index: {}]
  %s1 = inlined_call_operand.hbm [shape: f32[32,256], index: 1, kind: input, shape index: {}]
  %s2 = inlined_call_operand.hbm [shape: f32[1,256], index: 2, kind: input, shape index: {}]
  %s3 = inlined_call_operand.hbm [shape: f32[256,128], index: 3, kind: input, shape index: {}]
  %s4 = inlined_call_operand.vmem [shape: f32[1,128], index: 4, kind: input, shape index: {}]
  %s5 = inlined_call_operand.vmem [shape: f32[8,128], index: 5, kind: input, shape index: {}]
  %s6 = inlined_call_operand.hbm [shape: f32[8,128], index: 6, kind: output, shape index: {}]
  %s7 = sld [smem:[#allocation0]]
  $region50: #{tpu_custom_call.1} parent=0
    _
  %s9 = ssub.s32 1, %s7
  %s10 = scalar_select 0, %s9, %s7
  $region1: #{tpu_custom_call.1} parent=0
    #allocation2 [shape = 'u8[4096]{0}', space=vmem, size = 0x1000, scoped, tag = 'input window, operand 0, single buffered']
    #allocation3 [shape = 's32[1]{0}', space=sflag, size = 0x4, scoped, tag = 'scoped memory for tpu_custom_call.1']
    #allocation4 [shape = 's32[1]{0}', space=sflag, size = 0x4, scoped, tag = 'scoped memory for tpu_custom_call.1']
    #allocation5 [shape = 'u8[32768]{0}', space=vmem, size = 0x8000, scoped, tag = 'input window, operand 1, single buffered']
    #allocation6 [shape = 's32[1]{0}', space=sflag, size = 0x4, scoped, tag = 'scoped memory for tpu_custom_call.1']
    #allocation7 [shape = 'u8[1024]{0}', space=vmem, size = 0x400, scoped, tag = 'input window, operand 2, single buffered']
    #allocation8 [shape = 'u8[131072]{0}', space=vmem, size = 0x20000, scoped, tag = 'input window, operand 3, single buffered']
    #allocation9 [shape = 's32[1]{0}', space=sflag, size = 0x4, scoped, tag = 'scoped memory for tpu_custom_call.1']
    #allocation10 [shape = 'u8[4096]{0}', space=vmem, size = 0x1000, scoped, tag = 'output window, operand 0, single buffered']
    %11 = vsyncpa [#allocation3], 0
    %12 = vsyncpa [#allocation6], 0
    %13 = vsyncpa [#allocation9], 0
    %14 = vsyncpa [#allocation4], 0
    // Predicated region
    $region2: #{tpu_custom_call.1} parent=1 // pred_check
      _
    $region3: #{tpu_custom_call.1} parent=1 // pred_check_branch
      %16 = sbr.rel (0) target = $region5
    $region4: #{tpu_custom_call.1} parent=1 // pred_region
      %s18 = ssub.s32 128, 128
      %19 = vsyncadd [#allocation3], %s18
      %s21 = sshll.u32 [#allocation2], 4
      %s22 = int_to_ptr.vmem [resolvable:$true] %s21
      %24 = dma.hbm_to_vmem [thread:$0]  %s0, 128, %s22, [#allocation3]
    $region5: #{tpu_custom_call.1} parent=1 // pred_fallthru
      _
    // Predicated region
    $region6: #{tpu_custom_call.1} parent=1 // pred_check
      _
    $region7: #{tpu_custom_call.1} parent=1 // pred_check_branch
      %26 = sbr.rel (0) target = $region9
    $region8: #{tpu_custom_call.1} parent=1 // pred_region
      %s28 = ssub.s32 1024, 1024
      %29 = vsyncadd [#allocation6], %s28
      %s30 = sshll.u32 [#allocation5], 4
      %s31 = int_to_ptr.vmem [resolvable:$true] %s30
      %36 = dma.hbm_to_vmem [thread:$0]  %s1, 1024, %s31, [#allocation6], 256, 256, 16
    $region9: #{tpu_custom_call.1} parent=1 // pred_fallthru
      _
    // Predicated region
    $region10: #{tpu_custom_call.1} parent=1 // pred_check
      _
    $region11: #{tpu_custom_call.1} parent=1 // pred_check_branch
      %38 = sbr.rel (0) target = $region13
    $region12: #{tpu_custom_call.1} parent=1 // pred_region
      %s40 = ssub.s32 32, 32
      %41 = vsyncadd [#allocation6], %s40
      %s43 = sshll.u32 [#allocation7], 4
      %s44 = int_to_ptr.vmem [resolvable:$true] %s43
      %46 = dma.hbm_to_vmem [thread:$0]  %s2, 32, %s44, [#allocation6]
    $region13: #{tpu_custom_call.1} parent=1 // pred_fallthru
      _
    // Predicated region
    $region14: #{tpu_custom_call.1} parent=1 // pred_check
      _
    $region15: #{tpu_custom_call.1} parent=1 // pred_check_branch
      %48 = sbr.rel (0) target = $region17
    $region16: #{tpu_custom_call.1} parent=1 // pred_region
      %s50 = ssub.s32 4096, 4096
      %51 = vsyncadd [#allocation9], %s50
      %s52 = sshll.u32 [#allocation8], 4
      %s53 = int_to_ptr.vmem [resolvable:$true] %s52
      %58 = dma.hbm_to_vmem [thread:$0]  %s3, 4096, %s53, [#allocation9], 128, 128, 8
    $region17: #{tpu_custom_call.1} parent=1 // pred_fallthru
      _
    // Predicated region
    $region18: #{tpu_custom_call.1} parent=1 // pred_check
      _
    $region19: #{tpu_custom_call.1} parent=1 // pred_check_branch
      %60 = sbr.rel (0) target = $region21
    $region20: #{tpu_custom_call.1} parent=1 // pred_region
      _
    $region21: #{tpu_custom_call.1} parent=1 // pred_fallthru
      _
    // Predicated region
    $region22: #{tpu_custom_call.1} parent=1 // pred_check
      _
    $region23: #{tpu_custom_call.1} parent=1 // pred_check_branch
      %62 = sbr.rel (0) target = $region25
    $region24: #{tpu_custom_call.1} parent=1 // pred_region
      _
    $region25: #{tpu_custom_call.1} parent=1 // pred_fallthru
      _
    // Predicated region
    $region26: #{tpu_custom_call.1} parent=1 // pred_check
      _
    $region27: #{tpu_custom_call.1} parent=1 // pred_check_branch
      %64 = sbr.rel (0) target = $region29
    $region28: #{tpu_custom_call.1} parent=1 // pred_region
      %65 = dma.done [#allocation3], 128
    $region29: #{tpu_custom_call.1} parent=1 // pred_fallthru
      _
    // Predicated region
    $region30: #{tpu_custom_call.1} parent=1 // pred_check
      _
    $region31: #{tpu_custom_call.1} parent=1 // pred_check_branch
      %67 = sbr.rel (0) target = $region33
    $region32: #{tpu_custom_call.1} parent=1 // pred_region
      %68 = dma.done [#allocation6], 1024
    $region33: #{tpu_custom_call.1} parent=1 // pred_fallthru
      _
    // Predicated region
    $region34: #{tpu_custom_call.1} parent=1 // pred_check
      _
    $region35: #{tpu_custom_call.1} parent=1 // pred_check_branch
      %70 = sbr.rel (0) target = $region37
    $region36: #{tpu_custom_call.1} parent=1 // pred_region
      %71 = dma.done [#allocation6], 32
    $region37: #{tpu_custom_call.1} parent=1 // pred_fallthru
      _
    // Predicated region
    $region38: #{tpu_custom_call.1} parent=1 // pred_check
      _
    $region39: #{tpu_custom_call.1} parent=1 // pred_check_branch
      %73 = sbr.rel (0) target = $region41
    $region40: #{tpu_custom_call.1} parent=1 // pred_region
      %74 = dma.done [#allocation9], 4096
    $region41: #{tpu_custom_call.1} parent=1 // pred_fallthru
      _
    %v75 = vld [vmem:[#allocation2] sm:$0xff]
    %v76 = vld [vmem:[#allocation5] sm:$0xff]
    %v77 = vld [vmem:[#allocation5 + $0x8] sm:$0xff]
    %v78 = vld [vmem:[#allocation5 + $0x10] sm:$0xff]
    %v79 = vld [vmem:[#allocation5 + $0x18] sm:$0xff]
    %v80 = vld [vmem:[#allocation5 + $0x20] sm:$0xff]
    %v81 = vld [vmem:[#allocation5 + $0x28] sm:$0xff]
    %v82 = vld [vmem:[#allocation5 + $0x30] sm:$0xff]
    %v83 = vld [vmem:[#allocation5 + $0x38] sm:$0xff]
    %v84 = vld [vmem:[#allocation7] sm:$0x3]
    %v86 = vlaneseq
    %v87 = vshrl.u32 %v86, 7
    %v88 = vsub.s32 0, %v87
    %v89 = vrot.slane %v84, %v88
    %v90 = vlaneseq
    %v91 = vshrl.u32 %v90, 7
    %v92 = vsub.s32 1, %v91
    %v93 = vrot.slane %v84, %v92
    %vm96 = vcmask 261120
    %v98 = vsel %vm96, %v75, 0
    %100 = vmatprep.subr.mxu0 0.0
    %101 = vmatpush1.msra.mxu0 0.0
    %102 = vmatprep.subr.mxu0 0.0
    %103 = vmatpush1.msra.mxu0 0.0
    %104 = vmatprep.subr.mxu0 0.0
    %105 = vmatpush1.msra.mxu0 0.0
    %106 = vmatprep.subr.mxu0 0.0
    %107 = vmatpush1.msra.mxu0 0.0
    %108 = vmatprep.subr.mxu0 0.0
    %109 = vmatpush1.msra.mxu0 0.0
    %110 = vmatprep.subr.mxu0 0.0
    %111 = vmatpush1.msra.mxu0 0.0
    %112 = vmatprep.subr.mxu0 0.0
    %113 = vmatpush1.msra.mxu0 0.0
    %114 = vmatprep.subr.mxu0 0.0
    %115 = vmatpush1.msra.mxu0 0.0
    %116 = vmatprep.subr.mxu0 0.0
    %117 = vmatpush1.msra.mxu0 0.0
    %118 = vmatprep.subr.mxu0 0.0
    %119 = vmatpush1.msra.mxu0 0.0
    %120 = vmatprep.subr.mxu0 0.0
    %121 = vmatpush1.msra.mxu0 0.0
    %122 = vmatprep.subr.mxu0 0.0
    %123 = vmatpush1.msra.mxu0 0.0
    %124 = vmatprep.subr.mxu0 %v83
    %125 = vmatpush1.msra.mxu0 %v82
    %126 = vmatprep.subr.mxu0 %v81
    %127 = vmatpush1.msra.mxu0 %v80
    %128 = vmatprep.subr.mxu0 %v79
    %129 = vmatpush1.msra.mxu0 %v78
    %130 = vmatprep.subr.mxu0 %v77
    %131 = vmatpush1.msra.mxu0 %v76
    %132 = vmatprep.subr.mxu0 0.0
    %133 = vmatpush2.msra.mxu0 0.0
    %134 = vmatprep.subr.mxu0 0.0
    %135 = vmatpush2.msra.mxu0 0.0
    %136 = vmatprep.subr.mxu0 0.0
    %137 = vmatpush2.msra.mxu0 0.0
    %138 = vmatprep.subr.mxu0 0.0
    %139 = vmatpush2.msra.mxu0 0.0
    %140 = vmatprep.subr.mxu0 0.0
    %141 = vmatpush2.msra.mxu0 0.0
    %142 = vmatprep.subr.mxu0 0.0
    %143 = vmatpush2.msra.mxu0 0.0
    %144 = vmatprep.subr.mxu0 0.0
    %145 = vmatpush2.msra.mxu0 0.0
    %146 = vmatprep.subr.mxu0 0.0
    %147 = vmatpush2.msra.mxu0 0.0
    %148 = vmatprep.subr.mxu0 0.0
    %149 = vmatpush2.msra.mxu0 0.0
    %150 = vmatprep.subr.mxu0 0.0
    %151 = vmatpush2.msra.mxu0 0.0
    %152 = vmatprep.subr.mxu0 0.0
    %153 = vmatpush2.msra.mxu0 0.0
    %154 = vmatprep.subr.mxu0 0.0
    %155 = vmatpush2.msra.mxu0 0.0
    %156 = vmatprep.subr.mxu0 0.0
    %157 = vmatpush2.msra.mxu0 0.0
    %158 = vmatprep.subr.mxu0 0.0
    %159 = vmatpush2.msra.mxu0 0.0
    %160 = vmatprep.subr.mxu0 0.0
    %161 = vmatpush2.msra.mxu0 0.0
    %162 = vmatprep.subr.mxu0 0.0
    %163 = vmatpush2.msra.mxu0 0.0
    %164 = vmatprep.mubr.f32.mxu0 0.0
    %165 = vmatmul.mubr.f32.gmra.mxu0 %v98
    %v166 = vpop.f32.mrf.mxu0
    %v167 = vadd.f32 %v89, %v166
    %v168 = vpop.f32.mrf.mxu0
    %v169 = vadd.f32 %v93, %v168
    %170 = vdwg.mxu0
    %v171 = vmax.f32 %v167, 0.0
    %v172 = vmax.f32 %v169, 0.0
    %v173 = vld [vmem:[#allocation8] sm:$0xff]
    %v174 = vld [vmem:[#allocation8 + $0x8] sm:$0xff]
    %v175 = vld [vmem:[#allocation8 + $0x10] sm:$0xff]
    %v176 = vld [vmem:[#allocation8 + $0x18] sm:$0xff]
    %v177 = vld [vmem:[#allocation8 + $0x20] sm:$0xff]
    %v178 = vld [vmem:[#allocation8 + $0x28] sm:$0xff]
    %v179 = vld [vmem:[#allocation8 + $0x30] sm:$0xff]
    %v180 = vld [vmem:[#allocation8 + $0x38] sm:$0xff]
    %v181 = vld [vmem:[#allocation8 + $0x40] sm:$0xff]
    %v182 = vld [vmem:[#allocation8 + $0x48] sm:$0xff]
    %v183 = vld [vmem:[#allocation8 + $0x50] sm:$0xff]
    %v184 = vld [vmem:[#allocation8 + $0x58] sm:$0xff]
    %v185 = vld [vmem:[#allocation8 + $0x60] sm:$0xff]
    %v186 = vld [vmem:[#allocation8 + $0x68] sm:$0xff]
    %v187 = vld [vmem:[#allocation8 + $0x70] sm:$0xff]
    %v188 = vld [vmem:[#allocation8 + $0x78] sm:$0xff]
    %v189 = vld [vmem:[#allocation8 + $0x80] sm:$0xff]
    %v190 = vld [vmem:[#allocation8 + $0x88] sm:$0xff]
    %v191 = vld [vmem:[#allocation8 + $0x90] sm:$0xff]
    %v192 = vld [vmem:[#allocation8 + $0x98] sm:$0xff]
    %v193 = vld [vmem:[#allocation8 + $0xa0] sm:$0xff]
    %v194 = vld [vmem:[#allocation8 + $0xa8] sm:$0xff]
    %v195 = vld [vmem:[#allocation8 + $0xb0] sm:$0xff]
    %v196 = vld [vmem:[#allocation8 + $0xb8] sm:$0xff]
    %v197 = vld [vmem:[#allocation8 + $0xc0] sm:$0xff]
    %v198 = vld [vmem:[#allocation8 + $0xc8] sm:$0xff]
    %v199 = vld [vmem:[#allocation8 + $0xd0] sm:$0xff]
    %v200 = vld [vmem:[#allocation8 + $0xd8] sm:$0xff]
    %v201 = vld [vmem:[#allocation8 + $0xe0] sm:$0xff]
    %v202 = vld [vmem:[#allocation8 + $0xe8] sm:$0xff]
    %v203 = vld [vmem:[#allocation8 + $0xf0] sm:$0xff]
    %v204 = vld [vmem:[#allocation8 + $0xf8] sm:$0xff]
    %v205 = vld [vmem:[%s4] sm:$0x1]
    %v207 = vlaneseq
    %v208 = vshrl.u32 %v207, 7
    %v209 = vsub.s32 0, %v208
    %v210 = vrot.slane %v205, %v209
    %212 = vmatprep.subr.mxu0 0.0
    %213 = vmatpush1.msra.mxu0 %v188
    %214 = vmatprep.subr.mxu0 0.0
    %215 = vmatpush1.msra.mxu0 %v187
    %216 = vmatprep.subr.mxu0 0.0
    %217 = vmatpush1.msra.mxu0 %v186
    %218 = vmatprep.subr.mxu0 0.0
    %219 = vmatpush1.msra.mxu0 %v185
    %220 = vmatprep.subr.mxu0 0.0
    %221 = vmatpush1.msra.mxu0 %v184
    %222 = vmatprep.subr.mxu0 0.0
    %223 = vmatpush1.msra.mxu0 %v183
    %224 = vmatprep.subr.mxu0 0.0
    %225 = vmatpush1.msra.mxu0 %v182
    %226 = vmatprep.subr.mxu0 0.0
    %227 = vmatpush1.msra.mxu0 %v181
    %228 = vmatprep.subr.mxu0 0.0
    %229 = vmatpush1.msra.mxu0 %v180
    %230 = vmatprep.subr.mxu0 0.0
    %231 = vmatpush1.msra.mxu0 %v179
    %232 = vmatprep.subr.mxu0 0.0
    %233 = vmatpush1.msra.mxu0 %v178
    %234 = vmatprep.subr.mxu0 0.0
    %235 = vmatpush1.msra.mxu0 %v177
    %236 = vmatprep.subr.mxu0 0.0
    %237 = vmatpush1.msra.mxu0 %v176
    %238 = vmatprep.subr.mxu0 0.0
    %239 = vmatpush1.msra.mxu0 %v175
    %240 = vmatprep.subr.mxu0 0.0
    %241 = vmatpush1.msra.mxu0 %v174
    %242 = vmatprep.subr.mxu0 0.0
    %243 = vmatpush1.msra.mxu0 %v173
    %244 = vmatprep.subr.mxu0 0.0
    %245 = vmatpush2.msra.mxu0 %v204
    %246 = vmatprep.subr.mxu0 0.0
    %247 = vmatpush2.msra.mxu0 %v203
    %248 = vmatprep.subr.mxu0 0.0
    %249 = vmatpush2.msra.mxu0 %v202
    %250 = vmatprep.subr.mxu0 0.0
    %251 = vmatpush2.msra.mxu0 %v201
    %252 = vmatprep.subr.mxu0 0.0
    %253 = vmatpush2.msra.mxu0 %v200
    %254 = vmatprep.subr.mxu0 0.0
    %255 = vmatpush2.msra.mxu0 %v199
    %256 = vmatprep.subr.mxu0 0.0
    %257 = vmatpush2.msra.mxu0 %v198
    %258 = vmatprep.subr.mxu0 0.0
    %259 = vmatpush2.msra.mxu0 %v197
    %260 = vmatprep.subr.mxu0 0.0
    %261 = vmatpush2.msra.mxu0 %v196
    %262 = vmatprep.subr.mxu0 0.0
    %263 = vmatpush2.msra.mxu0 %v195
    %264 = vmatprep.subr.mxu0 0.0
    %265 = vmatpush2.msra.mxu0 %v194
    %266 = vmatprep.subr.mxu0 0.0
    %267 = vmatpush2.msra.mxu0 %v193
    %268 = vmatprep.subr.mxu0 0.0
    %269 = vmatpush2.msra.mxu0 %v192
    %270 = vmatprep.subr.mxu0 0.0
    %271 = vmatpush2.msra.mxu0 %v191
    %272 = vmatprep.subr.mxu0 0.0
    %273 = vmatpush2.msra.mxu0 %v190
    %274 = vmatprep.subr.mxu0 0.0
    %275 = vmatpush2.msra.mxu0 %v189
    %276 = vmatprep.mubr.f32.mxu0 %v172
    %277 = vmatmul.mubr.f32.gmra.mxu0 %v171
    %v278 = vpop.f32.mrf.mxu0
    %v279 = vadd.f32 %v210, %v278
    %v280 = vpop.f32.mrf.mxu0
    %281 = vdwg.mxu0
    %v282 = vand.u32 2147483647, %v279
    %v283 = vsub.f32 0.0, %v282
    %v284 = vmul.f32 %v283, 1.442695
    %v285 = vpow.pop %v284
    %v286 = vmax.f32 %v279, 0.0
    %v287 = vadd.f32 %v285, 1.0
    %v288 = vlog2.pop %v287
    %v289 = vmul.f32 %v288, 0.6931472
    %v290 = vadd.f32 %v286, %v289
    %vm291 = vcmp.ge.f32.partialorder %v279, 0.0
    %v292 = vsel %vm291, 1.0, %v285
    %v293 = vrcp.pop %v287
    %v294 = vmul.f32 %v292, %v293
    %v295 = vld [vmem:[%s5] sm:$0xff]
    %vm296 = vcmp.lt.f32.partialorder %v295, %v294
    %v297 = vsel %vm296, 1, 0
    %v298 = vcvt.s32.f32 %v297
    %v299 = vmul.f32 %v298, %v279
    %v300 = vsub.f32 %v299, %v290
    %v301 = vmul.f32 %v294, %v279
    %v302 = vsub.f32 %v290, %v301
    %v303 = vlaneseq
    %v304 = vand.u32 %v303, 127
    %vm305 = vcmp.lt.s32.totalorder %v304, 16
    %vm306 = vcmp.lt.s32.totalorder %v304, 32
    %vm307 = vcmp.lt.s32.totalorder %v304, 48
    %v308 = vsel %vm307, %v302, 0.0
    %v309 = vsel %vm306, %v300, %v308
    %v310 = vsel %vm305, %v298, %v309
    %311 = vst [vmem:[#allocation10] sm:$0xff] %v310
    // Predicated region
    $region42: #{tpu_custom_call.1} parent=1 // pred_check
      _
    $region43: #{tpu_custom_call.1} parent=1 // pred_check_branch
      %313 = sbr.rel (0) target = $region45
    $region44: #{tpu_custom_call.1} parent=1 // pred_region
      %s315 = ssub.s32 128, 128
      %316 = vsyncadd [#allocation4], %s315
      %s318 = sshll.u32 [#allocation10], 4
      %s319 = int_to_ptr.vmem [resolvable:$true] %s318
      %321 = dma.vmem_to_hbm [thread:$0]  %s319, 128, %s6, [#allocation4]
    $region45: #{tpu_custom_call.1} parent=1 // pred_fallthru
      _
    // Predicated region
    $region46: #{tpu_custom_call.1} parent=1 // pred_check
      _
    $region47: #{tpu_custom_call.1} parent=1 // pred_check_branch
      %323 = sbr.rel (0) target = $region49
    $region48: #{tpu_custom_call.1} parent=1 // pred_region
      %324 = dma.done [#allocation4], 128
    $region49: #{tpu_custom_call.1} parent=1 // pred_fallthru
      _
    %325 = vsyncpa [#allocation3], 1
    %326 = vsyncpa [#allocation6], 1
    %327 = vsyncpa [#allocation9], 1
    %328 = vsyncpa [#allocation4], 1

</llo_original>
